<compile_context>
chip_gen: v7x
topology: tpu7x:2x2x1
jax: 0.10.0
libtpu: 0.0.40
codegen_flags: <defaults>
</compile_context>

<pallas_src>
import jax
import jax.numpy as jnp
from jax.experimental import pallas as pl
from jax.experimental.pallas import tpu as pltpu

HIDDEN = 256
LANE = 128


def _round_up(n, m):
    return ((n + m - 1) // m) * m


# ----------------------------- Pallas kernel -----------------------------

def _mlp2_kernel(x_ref, w1_ref, b1_ref, w2_ref, b2_ref, w3_ref, b3_ref, o_ref):
    # fc1 + ReLU  (bf16 operands on the MXU, f32 accumulate / elementwise)
    x = x_ref[...].astype(jnp.bfloat16)
    h1 = jnp.dot(x, w1_ref[...], preferred_element_type=jnp.float32) + b1_ref[...]
    h1 = jnp.maximum(h1, 0.0).astype(jnp.bfloat16)

    # fc2 + ReLU
    h2 = jnp.dot(h1, w2_ref[...], preferred_element_type=jnp.float32) + b2_ref[...]
    h2 = jnp.maximum(h2, 0.0).astype(jnp.bfloat16)

    # fc3 + tanh (output features zero-padded to a multiple of 128 lanes)
    out = jnp.dot(h2, w3_ref[...], preferred_element_type=jnp.float32) + b3_ref[...]
    o_ref[...] = jnp.tanh(out).astype(o_ref.dtype)


# ------------------------------ wrapper ------------------------------

def mlp2_forward(x, prep, *, tile_b=512):
    """Forward pass of MLPNetwork2 via a single batch-tiled pallas_call.

    x:    (B, state_dim) float32
    prep: dict from prepare_params() (bf16 weights, padded fc3, f32 biases)
    """
    B, d_in = x.shape
    h = prep["w1"].shape[1]
    d_out_pad = prep["w3"].shape[1]
    action_dim = prep["action_dim"]

    # Pad the batch to a multiple of the tile size (tile is a multiple of 8
    # sublanes so the (8, 128) block constraint always holds).
    tile_b = _round_up(min(tile_b, _round_up(B, 8)), 8)
    b_pad = _round_up(B, tile_b)
    if b_pad != B:
        x = jnp.pad(x, ((0, b_pad - B), (0, 0)))
    grid = (b_pad // tile_b,)

    resident = lambda i: (0, 0)  # weights/biases: same block every step

    out = pl.pallas_call(
        _mlp2_kernel,
        out_shape=jax.ShapeDtypeStruct((b_pad, d_out_pad), jnp.float32),
        grid_spec=pltpu.PrefetchScalarGridSpec(
            num_scalar_prefetch=0,
            grid=grid,
            in_specs=[
                pl.BlockSpec((tile_b, d_in), lambda i: (i, 0)),      # x tile
                pl.BlockSpec((d_in, h), resident),                   # w1
                pl.BlockSpec((1, h), resident),                      # b1
                pl.BlockSpec((h, h), resident),                      # w2
                pl.BlockSpec((1, h), resident),                      # b2
                pl.BlockSpec((h, d_out_pad), resident),              # w3
                pl.BlockSpec((1, d_out_pad), resident),              # b3
            ],
            out_specs=pl.BlockSpec((tile_b, d_out_pad), lambda i: (i, 0)),
        ),
        compiler_params=pltpu.CompilerParams(
            dimension_semantics=("parallel",),
            vmem_limit_bytes=32 * 1024 * 1024,
        ),
    )(x, prep["w1"], prep["b1"], prep["w2"], prep["b2"], prep["w3"], prep["b3"])

    return out[:B, :action_dim]


# ------------------------- params (init + prep) -------------------------

def init_params(key, state_dim, action_dim):
    """PyTorch nn.Linear default init (uniform +/- 1/sqrt(fan_in)), f32,
    weights stored transposed as (in_dim, out_dim)."""
    def linear(k, fan_in, fan_out):
        kw, kb = jax.random.split(k)
        bound = 1.0 / jnp.sqrt(float(fan_in))
        w = jax.random.uniform(kw, (fan_in, fan_out), jnp.float32, -bound, bound)
        b = jax.random.uniform(kb, (1, fan_out), jnp.float32, -bound, bound)
        return w, b

    k1, k2, k3 = jax.random.split(key, 3)
    w1, b1 = linear(k1, state_dim, HIDDEN)
    w2, b2 = linear(k2, HIDDEN, HIDDEN)
    w3, b3 = linear(k3, HIDDEN, action_dim)
    return dict(w1=w1, b1=b1, w2=w2, b2=b2, w3=w3, b3=b3)


def prepare_params(params):
    """Cast weights to bf16 (MXU operands) and zero-pad fc3's output features
    to a multiple of 128 lanes for lane-dense output stores."""
    action_dim = params["w3"].shape[1]
    d_out_pad = _round_up(action_dim, LANE)
    pad = d_out_pad - action_dim
    w3 = jnp.pad(params["w3"], ((0, 0), (0, pad)))
    b3 = jnp.pad(params["b3"], ((0, 0), (0, pad)))
    return dict(
        w1=params["w1"].astype(jnp.bfloat16), b1=params["b1"],
        w2=params["w2"].astype(jnp.bfloat16), b2=params["b2"],
        w3=w3.astype(jnp.bfloat16), b3=b3,
        action_dim=action_dim,
    )


# ------------------------------ reference ------------------------------

def mlp2_reference(x, params):
    """Pure-JAX reference mirroring the kernel's bf16 operand precision."""
    bf = lambda a: a.astype(jnp.bfloat16).astype(jnp.float32)
    w1, w2, w3 = bf(params["w1"]), bf(params["w2"]), bf(params["w3"])
    h1 = jax.nn.relu(bf(x) @ w1 + params["b1"])
    h2 = jax.nn.relu(bf(h1) @ w2 + params["b2"])
    return jnp.tanh(bf(h2) @ w3 + params["b3"])


# --------------------------------- main ---------------------------------

if __name__ == "__main__":
    state_dim = 12     # MPE-like observation size
    action_dim = 5
    batch = 200        # non-multiple of the tile -> exercises batch padding

    key = jax.random.PRNGKey(0)
    kx, kp = jax.random.split(key)
    x = jax.random.normal(kx, (batch, state_dim), jnp.float32)
    params = init_params(kp, state_dim, action_dim)
    prep = prepare_params(params)

    out = mlp2_forward(x, prep, tile_b=128)   # grid of 2 batch tiles
    out = jax.block_until_ready(out)

    ref = mlp2_reference(x, params)
    assert out.shape == (batch, action_dim), f"bad shape {out.shape}"
    assert jnp.allclose(out, ref, atol=1e-4, rtol=1e-4), "kernel/reference mismatch"

    print("KERNEL_OK")
</pallas_src>

<mosaic_0001>
module attributes {stable_mosaic.version = 11 : i64} {
  func.func @_mlp2_kernel(%arg0: i32, %arg1: memref<128x12xf32, #tpu.memory_space<vmem>>, %arg2: memref<12x256xbf16, #tpu.memory_space<vmem>>, %arg3: memref<1x256xf32, #tpu.memory_space<vmem>>, %arg4: memref<256x256xbf16, #tpu.memory_space<vmem>>, %arg5: memref<1x256xf32, #tpu.memory_space<vmem>>, %arg6: memref<256x128xbf16, #tpu.memory_space<vmem>>, %arg7: memref<1x128xf32, #tpu.memory_space<vmem>>, %arg8: memref<128x128xf32, #tpu.memory_space<vmem>>) attributes {dimension_semantics = [#tpu.dimension_semantics<parallel>], iteration_bounds = array<i64: 2>, scalar_prefetch = 0 : i64, scratch_operands = 0 : i64, tpu.core_type = #tpu.core_type<tc>, window_params = [{transform_indices = @transform_0, window_bounds = array<i64: 128, 12>}, {pipeline_mode = #tpu.pipeline_mode<synchronous>, transform_indices = @transform_1, window_bounds = array<i64: 12, 256>}, {pipeline_mode = #tpu.pipeline_mode<synchronous>, transform_indices = @transform_2, window_bounds = array<i64: 1, 256>}, {pipeline_mode = #tpu.pipeline_mode<synchronous>, transform_indices = @transform_3, window_bounds = array<i64: 256, 256>}, {pipeline_mode = #tpu.pipeline_mode<synchronous>, transform_indices = @transform_4, window_bounds = array<i64: 1, 256>}, {pipeline_mode = #tpu.pipeline_mode<synchronous>, transform_indices = @transform_5, window_bounds = array<i64: 256, 128>}, {pipeline_mode = #tpu.pipeline_mode<synchronous>, transform_indices = @transform_6, window_bounds = array<i64: 1, 128>}, {transform_indices = @transform_7, window_bounds = array<i64: 128, 128>}]} {
    %c0 = arith.constant 0 : index
    %c0_0 = arith.constant 0 : index
    %0 = vector.load %arg1[%c0, %c0_0] : memref<128x12xf32, #tpu.memory_space<vmem>>, vector<128x12xf32>
    %1 = arith.truncf %0 : vector<128x12xf32> to vector<128x12xbf16>
    %c0_1 = arith.constant 0 : index
    %c0_2 = arith.constant 0 : index
    %2 = vector.load %arg2[%c0_1, %c0_2] : memref<12x256xbf16, #tpu.memory_space<vmem>>, vector<12x256xbf16>
    %cst = arith.constant dense<0.000000e+00> : vector<128x256xf32>
    %3 = tpu.matmul %1, %2, %cst {dimension_numbers = #tpu.dot_dimension_numbers<[1], [0], [0], [1], [0, 0, 1, 1], [], []>} : vector<128x12xbf16>, vector<12x256xbf16>, vector<128x256xf32> -> vector<128x256xf32>
    %c0_3 = arith.constant 0 : index
    %c0_4 = arith.constant 0 : index
    %4 = vector.load %arg3[%c0_3, %c0_4] : memref<1x256xf32, #tpu.memory_space<vmem>>, vector<1x256xf32>
    %5 = vector.broadcast %4 : vector<1x256xf32> to vector<128x256xf32>
    %6 = arith.addf %3, %5 : vector<128x256xf32>
    %cst_5 = arith.constant 0.000000e+00 : f32
    %7 = vector.broadcast %cst_5 : f32 to vector<128x256xf32>
    %8 = arith.maximumf %6, %7 : vector<128x256xf32>
    %9 = arith.truncf %8 : vector<128x256xf32> to vector<128x256xbf16>
    %c0_6 = arith.constant 0 : index
    %c0_7 = arith.constant 0 : index
    %10 = vector.load %arg4[%c0_6, %c0_7] : memref<256x256xbf16, #tpu.memory_space<vmem>>, vector<256x256xbf16>
    %cst_8 = arith.constant dense<0.000000e+00> : vector<128x256xf32>
    %11 = tpu.matmul %9, %10, %cst_8 {dimension_numbers = #tpu.dot_dimension_numbers<[1], [0], [0], [1], [0, 0, 1, 1], [], []>} : vector<128x256xbf16>, vector<256x256xbf16>, vector<128x256xf32> -> vector<128x256xf32>
    %c0_9 = arith.constant 0 : index
    %c0_10 = arith.constant 0 : index
    %12 = vector.load %arg5[%c0_9, %c0_10] : memref<1x256xf32, #tpu.memory_space<vmem>>, vector<1x256xf32>
    %13 = vector.broadcast %12 : vector<1x256xf32> to vector<128x256xf32>
    %14 = arith.addf %11, %13 : vector<128x256xf32>
    %cst_11 = arith.constant 0.000000e+00 : f32
    %15 = vector.broadcast %cst_11 : f32 to vector<128x256xf32>
    %16 = arith.maximumf %14, %15 : vector<128x256xf32>
    %17 = arith.truncf %16 : vector<128x256xf32> to vector<128x256xbf16>
    %c0_12 = arith.constant 0 : index
    %c0_13 = arith.constant 0 : index
    %18 = vector.load %arg6[%c0_12, %c0_13] : memref<256x128xbf16, #tpu.memory_space<vmem>>, vector<256x128xbf16>
    %cst_14 = arith.constant dense<0.000000e+00> : vector<128x128xf32>
    %19 = tpu.matmul %17, %18, %cst_14 {dimension_numbers = #tpu.dot_dimension_numbers<[1], [0], [0], [1], [0, 0, 1, 1], [], []>} : vector<128x256xbf16>, vector<256x128xbf16>, vector<128x128xf32> -> vector<128x128xf32>
    %c0_15 = arith.constant 0 : index
    %c0_16 = arith.constant 0 : index
    %20 = vector.load %arg7[%c0_15, %c0_16] : memref<1x128xf32, #tpu.memory_space<vmem>>, vector<1x128xf32>
    %21 = vector.broadcast %20 : vector<1x128xf32> to vector<128x128xf32>
    %22 = arith.addf %19, %21 : vector<128x128xf32>
    %23 = math.tanh %22 : vector<128x128xf32>
    %c0_17 = arith.constant 0 : index
    %c0_18 = arith.constant 0 : index
    %24 = vector.load %arg8[%c0_17, %c0_18] : memref<128x128xf32, #tpu.memory_space<vmem>>, vector<128x128xf32>
    tpu.vector_store %arg8[%c0_17, %c0_18], %23 {strides = array<i32>} : memref<128x128xf32, #tpu.memory_space<vmem>>, vector<128x128xf32>,
    return
  }
  func.func @transform_0(%arg0: i32) -> (i32, i32) {
    %c0_i32 = arith.constant 0 : i32
    %c0_i32_0 = arith.constant 0 : i32
    return %arg0, %c0_i32 : i32, i32
  }
  func.func @transform_1(%arg0: i32) -> (i32, i32) {
    %c0_i32 = arith.constant 0 : i32
    %c0_i32_0 = arith.constant 0 : i32
    %c0_i32_1 = arith.constant 0 : i32
    return %c0_i32, %c0_i32_0 : i32, i32
  }
  func.func @transform_2(%arg0: i32) -> (i32, i32) {
    %c0_i32 = arith.constant 0 : i32
    %c0_i32_0 = arith.constant 0 : i32
    %c0_i32_1 = arith.constant 0 : i32
    return %c0_i32, %c0_i32_0 : i32, i32
  }
  func.func @transform_3(%arg0: i32) -> (i32, i32) {
    %c0_i32 = arith.constant 0 : i32
    %c0_i32_0 = arith.constant 0 : i32
    %c0_i32_1 = arith.constant 0 : i32
    return %c0_i32, %c0_i32_0 : i32, i32
  }
  func.func @transform_4(%arg0: i32) -> (i32, i32) {
    %c0_i32 = arith.constant 0 : i32
    %c0_i32_0 = arith.constant 0 : i32
    %c0_i32_1 = arith.constant 0 : i32
    return %c0_i32, %c0_i32_0 : i32, i32
  }
  func.func @transform_5(%arg0: i32) -> (i32, i32) {
    %c0_i32 = arith.constant 0 : i32
    %c0_i32_0 = arith.constant 0 : i32
    %c0_i32_1 = arith.constant 0 : i32
    return %c0_i32, %c0_i32_0 : i32, i32
  }
  func.func @transform_6(%arg0: i32) -> (i32, i32) {
    %c0_i32 = arith.constant 0 : i32
    %c0_i32_0 = arith.constant 0 : i32
    %c0_i32_1 = arith.constant 0 : i32
    return %c0_i32, %c0_i32_0 : i32, i32
  }
  func.func @transform_7(%arg0: i32) -> (i32, i32) {
    %c0_i32 = arith.constant 0 : i32
    %c0_i32_0 = arith.constant 0 : i32
    return %arg0, %c0_i32 : i32, i32
  }
}

</mosaic_0001>

<llo_original>
// kernel: tpu_custom_call.1
$region0: #{tpu_custom_call.1}
  #allocation0 [shape = 'u32[]', space=smem, size = 0x4, offset = 0x4, fixed_abs, tag = 'smem constant byte address 0x4 - core index']
  #allocation1 [shape = 'u32[144,128]{1,0:T(1,128)}', space=vmem, size = 0x12000, scoped, tag = 'internal scratch']
  %s0 = inlined_call_operand.vmem [shape: f32[256,12], index: 0, kind: input, shape index: {}]
  %s1 = inlined_call_operand.vmem [shape: bf16[12,256], index: 1, kind: input, shape index: {}]
  %s2 = inlined_call_operand.vmem [shape: f32[1,256], index: 2, kind: input, shape index: {}]
  %s3 = inlined_call_operand.vmem [shape: bf16[256,256], index: 3, kind: input, shape index: {}]
  %s4 = inlined_call_operand.vmem [shape: f32[1,256], index: 4, kind: input, shape index: {}]
  %s5 = inlined_call_operand.hbm [shape: bf16[256,128], index: 5, kind: input, shape index: {}]
  %s6 = inlined_call_operand.vmem [shape: f32[1,128], index: 6, kind: input, shape index: {}]
  %s7 = inlined_call_operand.hbm [shape: f32[256,128], index: 7, kind: output, shape index: {}]
  %s8 = sld [smem:[#allocation0]]
  $region65: #{tpu_custom_call.1} parent=0
    _
  %s10 = ssub.s32 1, %s8
  %s11 = scalar_select 0, %s10, %s8
  $region1: #{tpu_custom_call.1} parent=0
    #allocation2 [shape = 'u8[65536]{0}', space=vmem, size = 0x10000, scoped, tag = 'input window, operand 5, single buffered']
    #allocation3 [shape = 's32[2]{0}', space=sflag, size = 0x8, scoped, tag = 'scoped memory for tpu_custom_call.1']
    #allocation4 [shape = 's32[2]{0}', space=sflag, size = 0x8, scoped, tag = 'scoped memory for tpu_custom_call.1']
    #allocation5 [shape = 'u8[131072]{0}', space=vmem, size = 0x20000, scoped, tag = 'output window, operand 0']
    %12 = vsyncpa [#allocation3], 0
    %13 = vsyncpa [#allocation4], 0
    %s14 = scalar_lea.sflag [#allocation4], 1
    %15 = vsyncpa %s14, 0
    loop: start=0, step=1, limit=4
    $region2: #{tpu_custom_call.1} parent=1 // loop_pre_header
      _
    $region3: #{tpu_custom_call.1} parent=1 // loop_header
      %s17 = sphi 0, %s21
      %p18 = scmp.ge.s32.totalorder %s17, 4
      %s27 = sphi 0, %s29
      %s30 = sphi 0, %s27
      %s31 = sphi 0, %s30
      %s47 = sphi 0, %s31
      %s51 = sphi 0, %s51
      %s53 = sphi 0, %s51
      %s54 = sphi 0, %s53
      %s68 = sphi 0, %s54
      %s72 = sphi 0, %s72
      %s74 = sphi 0, %s72
      %s75 = sphi 0, %s74
      %s89 = sphi 0, %s75
      %s93 = sphi 0, %s93
      %s95 = sphi 0, %s93
      %s96 = sphi 0, %s95
      %s110 = sphi 0, %s96
      %s114 = sphi 0, %s114
      %s116 = sphi 0, %s114
      %s117 = sphi 0, %s116
      %s131 = sphi 0, %s117
      %s135 = sphi 0, %s135
      %s137 = sphi 0, %s135
      %s138 = sphi 0, %s137
      %s152 = sphi 0, %s138
      %s156 = sphi 0, %s156
      %s158 = sphi 0, %s156
      %s159 = sphi 0, %s158
      %s173 = sphi 0, %s159
      %s179 = sphi 0, %s181
      %s182 = sphi 0, %s179
      %s183 = sphi 0, %s182
      %s199 = sphi 0, %s183
    $region4: #{tpu_custom_call.1} parent=1 // loop_header_branch
      %20 = sbr.rel (%p18) target = $region8
    $region5: #{tpu_custom_call.1} parent=1 // loop_body
      %s22 = ssub.s32 %s17, 1
      %s23 = ssub.s32 %s17, 2
      %s24 = sadd.s32 %s17, 1
      %s25 = ssub.s32 %s17, %s24
      %p26 = scmp.eq.s32.totalorder %s25, 0
      %s28 = sadd.s32 %s27, 1
      %s29 = scalar_select %p26, %s27, %s28
      %p32 = pneg %p26
      %p33 = scmp.eq.s32.totalorder %s17, 1
      %p34 = por %p32, %p33
      %p35 = scmp.ne.s32.totalorder %s27, %s30
      %p36 = scmp.eq.s32.totalorder %s17, 0
      %p37 = por %p35, %p36
      %p38 = scmp.ne.s32.totalorder %s27, %s30
      %p39 = scmp.eq.s32.totalorder %s22, 1
      %p40 = por %p38, %p39
      %p41 = scmp.ne.s32.totalorder %s30, %s31
      %p42 = scmp.eq.s32.totalorder %s22, 0
      %p43 = por %p41, %p42
      %p44 = scmp.ne.s32.totalorder %s30, %s31
      %p45 = scmp.eq.s32.totalorder %s23, 1
      %p46 = por %p44, %p45
      %p48 = scmp.ne.s32.totalorder %s31, %s47
      %p49 = scmp.eq.s32.totalorder %s23, 0
      %p50 = por %p48, %p49
      %s52 = sadd.s32 %s51, 1
      %p55 = scmp.eq.s32.totalorder %s17, 1
      %p56 = scmp.ne.s32.totalorder %s51, %s53
      %p57 = scmp.eq.s32.totalorder %s17, 0
      %p58 = por %p56, %p57
      %p59 = scmp.ne.s32.totalorder %s51, %s53
      %p60 = scmp.eq.s32.totalorder %s22, 1
      %p61 = por %p59, %p60
      %p62 = scmp.ne.s32.totalorder %s53, %s54
      %p63 = scmp.eq.s32.totalorder %s22, 0
      %p64 = por %p62, %p63
      %p65 = scmp.ne.s32.totalorder %s53, %s54
      %p66 = scmp.eq.s32.totalorder %s23, 1
      %p67 = por %p65, %p66
      %p69 = scmp.ne.s32.totalorder %s54, %s68
      %p70 = scmp.eq.s32.totalorder %s23, 0
      %p71 = por %p69, %p70
      %s73 = sadd.s32 %s72, 1
      %p76 = scmp.eq.s32.totalorder %s17, 1
      %p77 = scmp.ne.s32.totalorder %s72, %s74
      %p78 = scmp.eq.s32.totalorder %s17, 0
      %p79 = por %p77, %p78
      %p80 = scmp.ne.s32.totalorder %s72, %s74
      %p81 = scmp.eq.s32.totalorder %s22, 1
      %p82 = por %p80, %p81
      %p83 = scmp.ne.s32.totalorder %s74, %s75
      %p84 = scmp.eq.s32.totalorder %s22, 0
      %p85 = por %p83, %p84
      %p86 = scmp.ne.s32.totalorder %s74, %s75
      %p87 = scmp.eq.s32.totalorder %s23, 1
      %p88 = por %p86, %p87
      %p90 = scmp.ne.s32.totalorder %s75, %s89
      %p91 = scmp.eq.s32.totalorder %s23, 0
      %p92 = por %p90, %p91
      %s94 = sadd.s32 %s93, 1
      %p97 = scmp.eq.s32.totalorder %s17, 1
      %p98 = scmp.ne.s32.totalorder %s93, %s95
      %p99 = scmp.eq.s32.totalorder %s17, 0
      %p100 = por %p98, %p99
      %p101 = scmp.ne.s32.totalorder %s93, %s95
      %p102 = scmp.eq.s32.totalorder %s22, 1
      %p103 = por %p101, %p102
      %p104 = scmp.ne.s32.totalorder %s95, %s96
      %p105 = scmp.eq.s32.totalorder %s22, 0
      %p106 = por %p104, %p105
      %p107 = scmp.ne.s32.totalorder %s95, %s96
      %p108 = scmp.eq.s32.totalorder %s23, 1
      %p109 = por %p107, %p108
      %p111 = scmp.ne.s32.totalorder %s96, %s110
      %p112 = scmp.eq.s32.totalorder %s23, 0
      %p113 = por %p111, %p112
      %s115 = sadd.s32 %s114, 1
      %p118 = scmp.eq.s32.totalorder %s17, 1
      %p119 = scmp.ne.s32.totalorder %s114, %s116
      %p120 = scmp.eq.s32.totalorder %s17, 0
      %p121 = por %p119, %p120
      %p122 = scmp.ne.s32.totalorder %s114, %s116
      %p123 = scmp.eq.s32.totalorder %s22, 1
      %p124 = por %p122, %p123
      %p125 = scmp.ne.s32.totalorder %s116, %s117
      %p126 = scmp.eq.s32.totalorder %s22, 0
      %p127 = por %p125, %p126
      %p128 = scmp.ne.s32.totalorder %s116, %s117
      %p129 = scmp.eq.s32.totalorder %s23, 1
      %p130 = por %p128, %p129
      %p132 = scmp.ne.s32.totalorder %s117, %s131
      %p133 = scmp.eq.s32.totalorder %s23, 0
      %p134 = por %p132, %p133
      %s136 = sadd.s32 %s135, 1
      %p139 = scmp.eq.s32.totalorder %s17, 1
      %p140 = scmp.ne.s32.totalorder %s135, %s137
      %p141 = scmp.eq.s32.totalorder %s17, 0
      %p142 = por %p140, %p141
      %p143 = scmp.ne.s32.totalorder %s135, %s137
      %p144 = scmp.eq.s32.totalorder %s22, 1
      %p145 = por %p143, %p144
      %p146 = scmp.ne.s32.totalorder %s137, %s138
      %p147 = scmp.eq.s32.totalorder %s22, 0
      %p148 = por %p146, %p147
      %p149 = scmp.ne.s32.totalorder %s137, %s138
      %p150 = scmp.eq.s32.totalorder %s23, 1
      %p151 = por %p149, %p150
      %p153 = scmp.ne.s32.totalorder %s138, %s152
      %p154 = scmp.eq.s32.totalorder %s23, 0
      %p155 = por %p153, %p154
      %s157 = sadd.s32 %s156, 1
      %p160 = scmp.eq.s32.totalorder %s17, 1
      %p161 = scmp.ne.s32.totalorder %s156, %s158
      %p162 = scmp.eq.s32.totalorder %s17, 0
      %p163 = por %p161, %p162
      %p164 = scmp.ne.s32.totalorder %s156, %s158
      %p165 = scmp.eq.s32.totalorder %s22, 1
      %p166 = por %p164, %p165
      %p167 = scmp.ne.s32.totalorder %s158, %s159
      %p168 = scmp.eq.s32.totalorder %s22, 0
      %p169 = por %p167, %p168
      %p170 = scmp.ne.s32.totalorder %s158, %s159
      %p171 = scmp.eq.s32.totalorder %s23, 1
      %p172 = por %p170, %p171
      %p174 = scmp.ne.s32.totalorder %s159, %s173
      %p175 = scmp.eq.s32.totalorder %s23, 0
      %p176 = por %p174, %p175
      %s177 = ssub.s32 %s17, %s24
      %p178 = scmp.eq.s32.totalorder %s177, 0
      %s180 = sadd.s32 %s179, 1
      %s181 = scalar_select %p178, %s179, %s180
      %p184 = pneg %p178
      %p185 = scmp.eq.s32.totalorder %s17, 1
      %p186 = por %p184, %p185
      %p187 = scmp.ne.s32.totalorder %s179, %s182
      %p188 = scmp.eq.s32.totalorder %s17, 0
      %p189 = por %p187, %p188
      %p190 = scmp.ne.s32.totalorder %s179, %s182
      %p191 = scmp.eq.s32.totalorder %s22, 1
      %p192 = por %p190, %p191
      %p193 = scmp.ne.s32.totalorder %s182, %s183
      %p194 = scmp.eq.s32.totalorder %s22, 0
      %p195 = por %p193, %p194
      %p196 = scmp.ne.s32.totalorder %s182, %s183
      %p197 = scmp.eq.s32.totalorder %s23, 1
      %p198 = por %p196, %p197
      %p200 = scmp.ne.s32.totalorder %s183, %s199
      %p201 = scmp.eq.s32.totalorder %s23, 0
      %p202 = por %p200, %p201
      %p203 = scmp.le.s32.totalorder 1, %s17
      %p204 = scmp.lt.s32.totalorder %s17, 3
      %p205 = pnand %p203, %p204
      %p206 = pneg %p205
      // Predicated region
      $region9: #{tpu_custom_call.1} parent=5 // pred_check
        _
      $region10: #{tpu_custom_call.1} parent=5 // pred_check_branch
        %208 = sbr.rel (%p205) target = $region12
      $region11: #{tpu_custom_call.1} parent=5 // pred_region
        %s209 = ssub.s32 %s17, 1
        // Predicated region
        $region13: #{tpu_custom_call.1} parent=11 // pred_check
          %p210 = pneg %p64
        $region14: #{tpu_custom_call.1} parent=11 // pred_check_branch
          %212 = sbr.rel (%p210) target = $region16
        $region15: #{tpu_custom_call.1} parent=11 // pred_region
          _
        $region16: #{tpu_custom_call.1} parent=11 // pred_fallthru
          _
        // Predicated region
        $region17: #{tpu_custom_call.1} parent=11 // pred_check
          %p213 = pneg %p85
        $region18: #{tpu_custom_call.1} parent=11 // pred_check_branch
          %215 = sbr.rel (%p213) target = $region20
        $region19: #{tpu_custom_call.1} parent=11 // pred_region
          _
        $region20: #{tpu_custom_call.1} parent=11 // pred_fallthru
          _
        // Predicated region
        $region21: #{tpu_custom_call.1} parent=11 // pred_check
          %p216 = pneg %p106
        $region22: #{tpu_custom_call.1} parent=11 // pred_check_branch
          %218 = sbr.rel (%p216) target = $region24
        $region23: #{tpu_custom_call.1} parent=11 // pred_region
          _
        $region24: #{tpu_custom_call.1} parent=11 // pred_fallthru
          _
        // Predicated region
        $region25: #{tpu_custom_call.1} parent=11 // pred_check
          %p219 = pneg %p127
        $region26: #{tpu_custom_call.1} parent=11 // pred_check_branch
          %221 = sbr.rel (%p219) target = $region28
        $region27: #{tpu_custom_call.1} parent=11 // pred_region
          _
        $region28: #{tpu_custom_call.1} parent=11 // pred_fallthru
          _
        // Predicated region
        $region29: #{tpu_custom_call.1} parent=11 // pred_check
          %p222 = pneg %p148
        $region30: #{tpu_custom_call.1} parent=11 // pred_check_branch
          %224 = sbr.rel (%p222) target = $region32
        $region31: #{tpu_custom_call.1} parent=11 // pred_region
          %s226 = ssub.s32 2048, 2048
          %227 = vsyncadd [#allocation3], %s226
          %s228 = sshll.u32 [#allocation2], 4
          %s229 = int_to_ptr.vmem [resolvable:$true] %s228
          %234 = dma.hbm_to_vmem [thread:$0]  %s5, 2048, %s229, [#allocation3], 64, 64, 4
        $region32: #{tpu_custom_call.1} parent=11 // pred_fallthru
          _
        // Predicated region
        $region33: #{tpu_custom_call.1} parent=11 // pred_check
          %p235 = pneg %p169
        $region34: #{tpu_custom_call.1} parent=11 // pred_check_branch
          %237 = sbr.rel (%p235) target = $region36
        $region35: #{tpu_custom_call.1} parent=11 // pred_region
          _
        $region36: #{tpu_custom_call.1} parent=11 // pred_fallthru
          _
      $region12: #{tpu_custom_call.1} parent=5 // pred_fallthru
        _
      %p238 = scmp.lt.s32.totalorder %s17, 2
      // Predicated region
      $region37: #{tpu_custom_call.1} parent=5 // pred_check
        %p239 = pneg %p238
      $region38: #{tpu_custom_call.1} parent=5 // pred_check_branch
        %241 = sbr.rel (%p239) target = $region40
      $region39: #{tpu_custom_call.1} parent=5 // pred_region
        // Predicated region
        $region41: #{tpu_custom_call.1} parent=39 // pred_check
          %p242 = pneg %p37
        $region42: #{tpu_custom_call.1} parent=39 // pred_check_branch
          %244 = sbr.rel (%p242) target = $region44
        $region43: #{tpu_custom_call.1} parent=39 // pred_region
          %s245 = smul.u32 16, %s17
          %p246 = scmp.lt.s32.totalorder %s245, 31
          %s247 = scalar_select %p246, %s245, 31
          %s248 = smul.addr %s247, 8
          %s249 = scalar_lea.vmem %s0, %s248
          %s250 = smul.u32 16, %s17
        $region44: #{tpu_custom_call.1} parent=39 // pred_fallthru
          _
      $region40: #{tpu_custom_call.1} parent=5 // pred_fallthru
        _
      %p251 = scmp.le.s32.totalorder 1, %s17
      %p252 = scmp.lt.s32.totalorder %s17, 3
      %p253 = pnand %p251, %p252
      %p254 = pneg %p253
      // Predicated region
      $region45: #{tpu_custom_call.1} parent=5 // pred_check
        _
      $region46: #{tpu_custom_call.1} parent=5 // pred_check_branch
        %256 = sbr.rel (%p253) target = $region48
      $region47: #{tpu_custom_call.1} parent=5 // pred_region
        %s257 = ssub.s32 %s17, 1
        // Predicated region
        $region49: #{tpu_custom_call.1} parent=47 // pred_check
          %p258 = pneg %p148
        $region50: #{tpu_custom_call.1} parent=47 // pred_check_branch
          %260 = sbr.rel (%p258) target = $region52
        $region51: #{tpu_custom_call.1} parent=47 // pred_region
          %261 = dma.done [#allocation3], 2048
        $region52: #{tpu_custom_call.1} parent=47 // pred_fallthru
          _
        %s262 = smul.u32 16, %s22
        %p263 = scmp.lt.s32.totalorder %s262, 31
        %s264 = scalar_select %p263, %s262, 31
        %s265 = smul.addr %s264, 8
        %s266 = scalar_lea.vmem %s0, %s265
        %p267 = pneg %p43
        %p268 = pneg %p40
        %p269 = pneg %p64
        %p270 = pneg %p61
        %p271 = pneg %p85
        %p272 = pneg %p82
        %p273 = pneg %p106
        %p274 = pneg %p103
        %p275 = pneg %p127
        %p276 = pneg %p124
        %p277 = pneg %p148
        %p278 = pneg %p145
        %p279 = pneg %p169
        %p280 = pneg %p166
        %p281 = pneg %p195
        %p282 = pneg %p192
        %s283 = sand.u32 %s182, 1
        %s284 = scalar_lea.sflag [#allocation4], %s283
        %s285 = sand.u32 %s182, 1
        %s286 = smul.addr %s285, 128
        %s287 = scalar_lea.vmem [#allocation5], %s286
        %s288 = smul.u32 16, %s22
        %p289 = scmp.lt.s32.totalorder %s288, 31
        %s290 = scalar_select %p289, %s288, 31
        %s291 = smul.addr %s290, 8
        %s292 = scalar_lea.vmem %s0, %s291
        %s293 = smul.u32 16, %s22
        %s294 = smul.u32 16, %s22
        %v296 = vld [vmem:[%s292] sm:$0xff]
        %v297 = vld [vmem:[%s292 + $0x8] sm:$0xff]
        %v298 = vld [vmem:[%s292 + $0x10] sm:$0xff]
        %v299 = vld [vmem:[%s292 + $0x18] sm:$0xff]
        %v300 = vld [vmem:[%s292 + $0x20] sm:$0xff]
        %v301 = vld [vmem:[%s292 + $0x28] sm:$0xff]
        %v302 = vld [vmem:[%s292 + $0x30] sm:$0xff]
        %v303 = vld [vmem:[%s292 + $0x38] sm:$0xff]
        %v304 = vld [vmem:[%s292 + $0x40] sm:$0xff]
        %v305 = vld [vmem:[%s292 + $0x48] sm:$0xff]
        %v306 = vld [vmem:[%s292 + $0x50] sm:$0xff]
        %v307 = vld [vmem:[%s292 + $0x58] sm:$0xff]
        %v308 = vld [vmem:[%s292 + $0x60] sm:$0xff]
        %v309 = vld [vmem:[%s292 + $0x68] sm:$0xff]
        %v310 = vld [vmem:[%s292 + $0x70] sm:$0xff]
        %v311 = vld [vmem:[%s292 + $0x78] sm:$0xff]
        %v312 = vpack.c.bf16 %v297, %v296
        %v313 = vpack.c.bf16 %v299, %v298
        %v314 = vpack.c.bf16 %v301, %v300
        %v315 = vpack.c.bf16 %v303, %v302
        %v316 = vpack.c.bf16 %v305, %v304
        %v317 = vpack.c.bf16 %v307, %v306
        %v318 = vpack.c.bf16 %v309, %v308
        %v319 = vpack.c.bf16 %v311, %v310
        %v320 = vld [vmem:[%s1] sm:$0xff]
        %v321 = vld [vmem:[%s1 + $0x8] sm:$0x33]
        %v322 = vld [vmem:[%s2] sm:$0x3]
        %v324 = vlaneseq
        %v325 = vshrl.u32 %v324, 7
        %v326 = vsub.s32 0, %v325
        %v327 = vrot.slane %v322, %v326
        %v328 = vlaneseq
        %v329 = vshrl.u32 %v328, 7
        %v330 = vsub.s32 1, %v329
        %v331 = vrot.slane %v322, %v330
        %v336 = vunpack.c.l.b16 %v320
        %v337 = vunpack.c.h.b16 %v320
        %v338 = vunpack.c.l.b16 %v321
        %v339 = vunpack.c.h.b16 %v321
        %v340 = vpack.c.b16 %v338, %v336
        %v341 = vpack.c.b16 %v339, %v337
        %vm342 = vcmask 97280
        %v344 = vsel %vm342, %v312, 0
        %v347 = vsel %vm342, %v313, 0
        %v350 = vsel %vm342, %v314, 0
        %v353 = vsel %vm342, %v315, 0
        %v356 = vsel %vm342, %v316, 0
        %v359 = vsel %vm342, %v317, 0
        %v362 = vsel %vm342, %v318, 0
        %v365 = vsel %vm342, %v319, 0
        %vm367 = vcmask 1045504
        %v369 = vsel %vm367, %v340, 0
        %v372 = vsel %vm367, %v341, 0
        %374 = vmatprep.subr.bf16.mxu0 %v372
        %375 = vmatpush1.bf16.msra.mxu0 %v369
        %376 = vmatprep.subr.bf16.mxu0 0
        %377 = vmatpush1.bf16.msra.mxu0 0
        %378 = vmatprep.subr.bf16.mxu0 0
        %379 = vmatpush1.bf16.msra.mxu0 0
        %380 = vmatprep.subr.bf16.mxu0 0
        %381 = vmatpush1.bf16.msra.mxu0 0
        %382 = vmatprep.subr.bf16.mxu0 0
        %383 = vmatpush1.bf16.msra.mxu0 0
        %384 = vmatprep.subr.bf16.mxu0 0
        %385 = vmatpush1.bf16.msra.mxu0 0
        %386 = vmatprep.subr.bf16.mxu0 0
        %387 = vmatpush1.bf16.msra.mxu0 0
        %388 = vmatprep.subr.bf16.mxu0 0
        %389 = vmatpush1.bf16.msra.mxu0 0
        %390 = vmatprep.subr.bf16.mxu0 0
        %391 = vmatpush1.bf16.msra.mxu0 0
        %392 = vmatprep.subr.bf16.mxu0 0
        %393 = vmatpush1.bf16.msra.mxu0 0
        %394 = vmatprep.subr.bf16.mxu0 0
        %395 = vmatpush1.bf16.msra.mxu0 0
        %396 = vmatprep.subr.bf16.mxu0 0
        %397 = vmatpush1.bf16.msra.mxu0 0
        %398 = vmatprep.subr.bf16.mxu0 0
        %399 = vmatpush1.bf16.msra.mxu0 0
        %400 = vmatprep.subr.bf16.mxu0 0
        %401 = vmatpush1.bf16.msra.mxu0 0
        %402 = vmatprep.subr.bf16.mxu0 0
        %403 = vmatpush1.bf16.msra.mxu0 0
        %404 = vmatprep.subr.bf16.mxu0 0
        %405 = vmatpush1.bf16.msra.mxu0 0
        %406 = vmatprep.mubr.bf16.mxu0 0
        %407 = vmatmul.mubr.bf16.gmra.mrb[0].mxu0 %v344
        %v408 = vpop.f32.mrb[0].mxu0
        %v409 = vadd.f32 %v327, %v408
        %v410 = vpop.f32.mrb[0].mxu0
        %v411 = vadd.f32 %v331, %v410
        %v412 = vpop.f32.mrb[0].mxu0
        %v413 = vadd.f32 %v327, %v412
        %v414 = vpop.f32.mrb[0].mxu0
        %v415 = vadd.f32 %v331, %v414
        %416 = vmatprep.mubr.bf16.mxu0 0
        %417 = vmatmul.mubr.bf16.gmra.mrb[0].mxu0 %v347
        %v418 = vpop.f32.mrb[0].mxu0
        %v419 = vadd.f32 %v327, %v418
        %v420 = vpop.f32.mrb[0].mxu0
        %v421 = vadd.f32 %v331, %v420
        %v422 = vpop.f32.mrb[0].mxu0
        %v423 = vadd.f32 %v327, %v422
        %v424 = vpop.f32.mrb[0].mxu0
        %v425 = vadd.f32 %v331, %v424
        %426 = vmatprep.mubr.bf16.mxu0 0
        %427 = vmatmul.mubr.bf16.gmra.mrb[0].mxu0 %v350
        %v428 = vpop.f32.mrb[0].mxu0
        %v429 = vadd.f32 %v327, %v428
        %v430 = vpop.f32.mrb[0].mxu0
        %v431 = vadd.f32 %v331, %v430
        %v432 = vpop.f32.mrb[0].mxu0
        %v433 = vadd.f32 %v327, %v432
        %v434 = vpop.f32.mrb[0].mxu0
        %v435 = vadd.f32 %v331, %v434
        %436 = vmatprep.mubr.bf16.mxu0 0
        %437 = vmatmul.mubr.bf16.gmra.mrb[0].mxu0 %v353
        %v438 = vpop.f32.mrb[0].mxu0
        %v439 = vadd.f32 %v327, %v438
        %v440 = vpop.f32.mrb[0].mxu0
        %v441 = vadd.f32 %v331, %v440
        %v442 = vpop.f32.mrb[0].mxu0
        %v443 = vadd.f32 %v327, %v442
        %v444 = vpop.f32.mrb[0].mxu0
        %v445 = vadd.f32 %v331, %v444
        %446 = vmatprep.mubr.bf16.mxu0 0
        %447 = vmatmul.mubr.bf16.gmra.mrb[0].mxu0 %v356
        %v448 = vpop.f32.mrb[0].mxu0
        %v449 = vadd.f32 %v327, %v448
        %v450 = vpop.f32.mrb[0].mxu0
        %v451 = vadd.f32 %v331, %v450
        %v452 = vpop.f32.mrb[0].mxu0
        %v453 = vadd.f32 %v327, %v452
        %v454 = vpop.f32.mrb[0].mxu0
        %v455 = vadd.f32 %v331, %v454
        %456 = vmatprep.mubr.bf16.mxu0 0
        %457 = vmatmul.mubr.bf16.gmra.mrb[0].mxu0 %v359
        %v458 = vpop.f32.mrb[0].mxu0
        %v459 = vadd.f32 %v327, %v458
        %v460 = vpop.f32.mrb[0].mxu0
        %v461 = vadd.f32 %v331, %v460
        %v462 = vpop.f32.mrb[0].mxu0
        %v463 = vadd.f32 %v327, %v462
        %v464 = vpop.f32.mrb[0].mxu0
        %v465 = vadd.f32 %v331, %v464
        %466 = vmatprep.mubr.bf16.mxu0 0
        %467 = vmatmul.mubr.bf16.gmra.mrb[0].mxu0 %v362
        %v468 = vpop.f32.mrb[0].mxu0
        %v469 = vadd.f32 %v327, %v468
        %v470 = vpop.f32.mrb[0].mxu0
        %v471 = vadd.f32 %v331, %v470
        %v472 = vpop.f32.mrb[0].mxu0
        %v473 = vadd.f32 %v327, %v472
        %v474 = vpop.f32.mrb[0].mxu0
        %v475 = vadd.f32 %v331, %v474
        %476 = vmatprep.mubr.bf16.mxu0 0
        %477 = vmatmul.mubr.bf16.gmra.mrb[0].mxu0 %v365
        %v478 = vpop.f32.mrb[0].mxu0
        %v479 = vadd.f32 %v327, %v478
        %v480 = vpop.f32.mrb[0].mxu0
        %v481 = vadd.f32 %v331, %v480
        %v482 = vpop.f32.mrb[0].mxu0
        %v483 = vadd.f32 %v327, %v482
        %v484 = vpop.f32.mrb[0].mxu0
        %v485 = vadd.f32 %v331, %v484
        %486 = vdwg.mxu0
        %v487 = vmax.f32 %v409, 0.0
        %v488 = vmax.f32 %v411, 0.0
        %v489 = vmax.f32 %v413, 0.0
        %v490 = vmax.f32 %v415, 0.0
        %v491 = vmax.f32 %v419, 0.0
        %v492 = vmax.f32 %v421, 0.0
        %v493 = vmax.f32 %v423, 0.0
        %v494 = vmax.f32 %v425, 0.0
        %v495 = vmax.f32 %v429, 0.0
        %v496 = vmax.f32 %v431, 0.0
        %v497 = vmax.f32 %v433, 0.0
        %v498 = vmax.f32 %v435, 0.0
        %v499 = vmax.f32 %v439, 0.0
        %v500 = vmax.f32 %v441, 0.0
        %v501 = vmax.f32 %v443, 0.0
        %v502 = vmax.f32 %v445, 0.0
        %v503 = vmax.f32 %v449, 0.0
        %v504 = vmax.f32 %v451, 0.0
        %v505 = vmax.f32 %v453, 0.0
        %v506 = vmax.f32 %v455, 0.0
        %v507 = vmax.f32 %v459, 0.0
        %v508 = vmax.f32 %v461, 0.0
        %v509 = vmax.f32 %v463, 0.0
        %v510 = vmax.f32 %v465, 0.0
        %v511 = vmax.f32 %v469, 0.0
        %v512 = vmax.f32 %v471, 0.0
        %v513 = vmax.f32 %v473, 0.0
        %v514 = vmax.f32 %v475, 0.0
        %v515 = vmax.f32 %v479, 0.0
        %v516 = vmax.f32 %v481, 0.0
        %v517 = vmax.f32 %v483, 0.0
        %v518 = vmax.f32 %v485, 0.0
        %v519 = vpack.c.bf16 %v489, %v487
        %v520 = vpack.c.bf16 %v490, %v488
        %v521 = vpack.c.bf16 %v493, %v491
        %v522 = vpack.c.bf16 %v494, %v492
        %v523 = vpack.c.bf16 %v497, %v495
        %v524 = vpack.c.bf16 %v498, %v496
        %v525 = vpack.c.bf16 %v501, %v499
        %v526 = vpack.c.bf16 %v502, %v500
        %v527 = vpack.c.bf16 %v505, %v503
        %v528 = vpack.c.bf16 %v506, %v504
        %v529 = vpack.c.bf16 %v509, %v507
        %v530 = vpack.c.bf16 %v510, %v508
        %v531 = vpack.c.bf16 %v513, %v511
        %v532 = vpack.c.bf16 %v514, %v512
        %v533 = vpack.c.bf16 %v517, %v515
        %v534 = vpack.c.bf16 %v518, %v516
        %v535 = vld [vmem:[%s3] sm:$0xff]
        %v536 = vld [vmem:[%s3 + $0x8] sm:$0xff]
        %v537 = vld [vmem:[%s3 + $0x10] sm:$0xff]
        %v538 = vld [vmem:[%s3 + $0x18] sm:$0xff]
        %v539 = vld [vmem:[%s3 + $0x20] sm:$0xff]
        %v540 = vld [vmem:[%s3 + $0x28] sm:$0xff]
        %v541 = vld [vmem:[%s3 + $0x30] sm:$0xff]
        %v542 = vld [vmem:[%s3 + $0x38] sm:$0xff]
        %v543 = vld [vmem:[%s3 + $0x40] sm:$0xff]
        %v544 = vld [vmem:[%s3 + $0x48] sm:$0xff]
        %v545 = vld [vmem:[%s3 + $0x50] sm:$0xff]
        %v546 = vld [vmem:[%s3 + $0x58] sm:$0xff]
        %v547 = vld [vmem:[%s3 + $0x60] sm:$0xff]
        %v548 = vld [vmem:[%s3 + $0x68] sm:$0xff]
        %v549 = vld [vmem:[%s3 + $0x70] sm:$0xff]
        %v550 = vld [vmem:[%s3 + $0x78] sm:$0xff]
        %v551 = vld [vmem:[%s3 + $0x80] sm:$0xff]
        %v552 = vld [vmem:[%s3 + $0x88] sm:$0xff]
        %v553 = vld [vmem:[%s3 + $0x90] sm:$0xff]
        %v554 = vld [vmem:[%s3 + $0x98] sm:$0xff]
        %v555 = vld [vmem:[%s3 + $0xa0] sm:$0xff]
        %v556 = vld [vmem:[%s3 + $0xa8] sm:$0xff]
        %v557 = vld [vmem:[%s3 + $0xb0] sm:$0xff]
        %v558 = vld [vmem:[%s3 + $0xb8] sm:$0xff]
        %v559 = vld [vmem:[%s3 + $0xc0] sm:$0xff]
        %v560 = vld [vmem:[%s3 + $0xc8] sm:$0xff]
        %v561 = vld [vmem:[%s3 + $0xd0] sm:$0xff]
        %v562 = vld [vmem:[%s3 + $0xd8] sm:$0xff]
        %v563 = vld [vmem:[%s3 + $0xe0] sm:$0xff]
        %v564 = vld [vmem:[%s3 + $0xe8] sm:$0xff]
        %v565 = vld [vmem:[%s3 + $0xf0] sm:$0xff]
        %v566 = vld [vmem:[%s3 + $0xf8] sm:$0xff]
        %v567 = vld [vmem:[%s4] sm:$0x3]
        %v569 = vlaneseq
        %v570 = vshrl.u32 %v569, 7
        %v571 = vsub.s32 0, %v570
        %v572 = vrot.slane %v567, %v571
        %v573 = vlaneseq
        %v574 = vshrl.u32 %v573, 7
        %v575 = vsub.s32 1, %v574
        %v576 = vrot.slane %v567, %v575
        %v611 = vunpack.c.l.b16 %v535
        %v612 = vunpack.c.h.b16 %v535
        %v613 = vunpack.c.l.b16 %v536
        %v614 = vunpack.c.h.b16 %v536
        %v615 = vunpack.c.l.b16 %v537
        %v616 = vunpack.c.h.b16 %v537
        %v617 = vunpack.c.l.b16 %v538
        %v618 = vunpack.c.h.b16 %v538
        %v619 = vunpack.c.l.b16 %v539
        %v620 = vunpack.c.h.b16 %v539
        %v621 = vunpack.c.l.b16 %v540
        %v622 = vunpack.c.h.b16 %v540
        %v623 = vunpack.c.l.b16 %v541
        %v624 = vunpack.c.h.b16 %v541
        %v625 = vunpack.c.l.b16 %v542
        %v626 = vunpack.c.h.b16 %v542
        %v627 = vunpack.c.l.b16 %v543
        %v628 = vunpack.c.h.b16 %v543
        %v629 = vunpack.c.l.b16 %v544
        %v630 = vunpack.c.h.b16 %v544
        %v631 = vunpack.c.l.b16 %v545
        %v632 = vunpack.c.h.b16 %v545
        %v633 = vunpack.c.l.b16 %v546
        %v634 = vunpack.c.h.b16 %v546
        %v635 = vunpack.c.l.b16 %v547
        %v636 = vunpack.c.h.b16 %v547
        %v637 = vunpack.c.l.b16 %v548
        %v638 = vunpack.c.h.b16 %v548
        %v639 = vunpack.c.l.b16 %v549
        %v640 = vunpack.c.h.b16 %v549
        %v641 = vunpack.c.l.b16 %v550
        %v642 = vunpack.c.h.b16 %v550
        %v643 = vunpack.c.l.b16 %v551
        %v644 = vunpack.c.h.b16 %v551
        %v645 = vunpack.c.l.b16 %v552
        %v646 = vunpack.c.h.b16 %v552
        %v647 = vunpack.c.l.b16 %v553
        %v648 = vunpack.c.h.b16 %v553
        %v649 = vunpack.c.l.b16 %v554
        %v650 = vunpack.c.h.b16 %v554
        %v651 = vunpack.c.l.b16 %v555
        %v652 = vunpack.c.h.b16 %v555
        %v653 = vunpack.c.l.b16 %v556
        %v654 = vunpack.c.h.b16 %v556
        %v655 = vunpack.c.l.b16 %v557
        %v656 = vunpack.c.h.b16 %v557
        %v657 = vunpack.c.l.b16 %v558
        %v658 = vunpack.c.h.b16 %v558
        %v659 = vunpack.c.l.b16 %v559
        %v660 = vunpack.c.h.b16 %v559
        %v661 = vunpack.c.l.b16 %v560
        %v662 = vunpack.c.h.b16 %v560
        %v663 = vunpack.c.l.b16 %v561
        %v664 = vunpack.c.h.b16 %v561
        %v665 = vunpack.c.l.b16 %v562
        %v666 = vunpack.c.h.b16 %v562
        %v667 = vunpack.c.l.b16 %v563
        %v668 = vunpack.c.h.b16 %v563
        %v669 = vunpack.c.l.b16 %v564
        %v670 = vunpack.c.h.b16 %v564
        %v671 = vunpack.c.l.b16 %v565
        %v672 = vunpack.c.h.b16 %v565
        %v673 = vunpack.c.l.b16 %v566
        %v674 = vunpack.c.h.b16 %v566
        %v675 = vpack.c.b16 %v613, %v611
        %v676 = vpack.c.b16 %v614, %v612
        %v677 = vpack.c.b16 %v617, %v615
        %v678 = vpack.c.b16 %v618, %v616
        %v679 = vpack.c.b16 %v621, %v619
        %v680 = vpack.c.b16 %v622, %v620
        %v681 = vpack.c.b16 %v625, %v623
        %v682 = vpack.c.b16 %v626, %v624
        %v683 = vpack.c.b16 %v629, %v627
        %v684 = vpack.c.b16 %v630, %v628
        %v685 = vpack.c.b16 %v633, %v631
        %v686 = vpack.c.b16 %v634, %v632
        %v687 = vpack.c.b16 %v637, %v635
        %v688 = vpack.c.b16 %v638, %v636
        %v689 = vpack.c.b16 %v641, %v639
        %v690 = vpack.c.b16 %v642, %v640
        %v691 = vpack.c.b16 %v645, %v643
        %v692 = vpack.c.b16 %v646, %v644
        %v693 = vpack.c.b16 %v649, %v647
        %v694 = vpack.c.b16 %v650, %v648
        %v695 = vpack.c.b16 %v653, %v651
        %v696 = vpack.c.b16 %v654, %v652
        %v697 = vpack.c.b16 %v657, %v655
        %v698 = vpack.c.b16 %v658, %v656
        %v699 = vpack.c.b16 %v661, %v659
        %v700 = vpack.c.b16 %v662, %v660
        %v701 = vpack.c.b16 %v665, %v663
        %v702 = vpack.c.b16 %v666, %v664
        %v703 = vpack.c.b16 %v669, %v667
        %v704 = vpack.c.b16 %v670, %v668
        %v705 = vpack.c.b16 %v673, %v671
        %v706 = vpack.c.b16 %v674, %v672
        %739 = vmatprep.subr.bf16.mxu0 %v676
        %740 = vmatpush1.bf16.msra.mxu0 %v675
        %741 = vmatprep.subr.bf16.mxu0 %v678
        %742 = vmatpush1.bf16.msra.mxu0 %v677
        %743 = vmatprep.subr.bf16.mxu0 %v680
        %744 = vmatpush1.bf16.msra.mxu0 %v679
        %745 = vmatprep.subr.bf16.mxu0 %v682
        %746 = vmatpush1.bf16.msra.mxu0 %v681
        %747 = vmatprep.subr.bf16.mxu0 %v684
        %748 = vmatpush1.bf16.msra.mxu0 %v683
        %749 = vmatprep.subr.bf16.mxu0 %v686
        %750 = vmatpush1.bf16.msra.mxu0 %v685
        %751 = vmatprep.subr.bf16.mxu0 %v688
        %752 = vmatpush1.bf16.msra.mxu0 %v687
        %753 = vmatprep.subr.bf16.mxu0 %v690
        %754 = vmatpush1.bf16.msra.mxu0 %v689
        %755 = vmatprep.subr.bf16.mxu0 %v692
        %756 = vmatpush1.bf16.msra.mxu0 %v691
        %757 = vmatprep.subr.bf16.mxu0 %v694
        %758 = vmatpush1.bf16.msra.mxu0 %v693
        %759 = vmatprep.subr.bf16.mxu0 %v696
        %760 = vmatpush1.bf16.msra.mxu0 %v695
        %761 = vmatprep.subr.bf16.mxu0 %v698
        %762 = vmatpush1.bf16.msra.mxu0 %v697
        %763 = vmatprep.subr.bf16.mxu0 %v700
        %764 = vmatpush1.bf16.msra.mxu0 %v699
        %765 = vmatprep.subr.bf16.mxu0 %v702
        %766 = vmatpush1.bf16.msra.mxu0 %v701
        %767 = vmatprep.subr.bf16.mxu0 %v704
        %768 = vmatpush1.bf16.msra.mxu0 %v703
        %769 = vmatprep.subr.bf16.mxu0 %v706
        %770 = vmatpush1.bf16.msra.mxu0 %v705
        %771 = vmatprep.mubr.bf16.mxu0 %v520
        %772 = vmatmul.mubr.bf16.gmra.mrb[0].mxu0 %v519
        %v773 = vpop.f32.mrb[0].mxu0
        %v774 = vadd.f32 %v572, %v773
        %v775 = vpop.f32.mrb[0].mxu0
        %v776 = vadd.f32 %v576, %v775
        %v777 = vpop.f32.mrb[0].mxu0
        %v778 = vadd.f32 %v572, %v777
        %v779 = vpop.f32.mrb[0].mxu0
        %v780 = vadd.f32 %v576, %v779
        %781 = vmatprep.mubr.bf16.mxu0 %v522
        %782 = vmatmul.mubr.bf16.gmra.mrb[0].mxu0 %v521
        %v783 = vpop.f32.mrb[0].mxu0
        %v784 = vadd.f32 %v572, %v783
        %v785 = vpop.f32.mrb[0].mxu0
        %v786 = vadd.f32 %v576, %v785
        %v787 = vpop.f32.mrb[0].mxu0
        %v788 = vadd.f32 %v572, %v787
        %v789 = vpop.f32.mrb[0].mxu0
        %v790 = vadd.f32 %v576, %v789
        %791 = vmatprep.mubr.bf16.mxu0 %v524
        %792 = vmatmul.mubr.bf16.gmra.mrb[0].mxu0 %v523
        %v793 = vpop.f32.mrb[0].mxu0
        %v794 = vadd.f32 %v572, %v793
        %v795 = vpop.f32.mrb[0].mxu0
        %v796 = vadd.f32 %v576, %v795
        %v797 = vpop.f32.mrb[0].mxu0
        %v798 = vadd.f32 %v572, %v797
        %v799 = vpop.f32.mrb[0].mxu0
        %v800 = vadd.f32 %v576, %v799
        %801 = vmatprep.mubr.bf16.mxu0 %v526
        %802 = vmatmul.mubr.bf16.gmra.mrb[0].mxu0 %v525
        %v803 = vpop.f32.mrb[0].mxu0
        %v804 = vadd.f32 %v572, %v803
        %v805 = vpop.f32.mrb[0].mxu0
        %v806 = vadd.f32 %v576, %v805
        %v807 = vpop.f32.mrb[0].mxu0
        %v808 = vadd.f32 %v572, %v807
        %v809 = vpop.f32.mrb[0].mxu0
        %v810 = vadd.f32 %v576, %v809
        %811 = vmatprep.mubr.bf16.mxu0 %v528
        %812 = vmatmul.mubr.bf16.gmra.mrb[0].mxu0 %v527
        %v813 = vpop.f32.mrb[0].mxu0
        %v814 = vadd.f32 %v572, %v813
        %v815 = vpop.f32.mrb[0].mxu0
        %v816 = vadd.f32 %v576, %v815
        %v817 = vpop.f32.mrb[0].mxu0
        %v818 = vadd.f32 %v572, %v817
        %v819 = vpop.f32.mrb[0].mxu0
        %v820 = vadd.f32 %v576, %v819
        %821 = vmatprep.mubr.bf16.mxu0 %v530
        %822 = vmatmul.mubr.bf16.gmra.mrb[0].mxu0 %v529
        %v823 = vpop.f32.mrb[0].mxu0
        %v824 = vadd.f32 %v572, %v823
        %v825 = vpop.f32.mrb[0].mxu0
        %v826 = vadd.f32 %v576, %v825
        %v827 = vpop.f32.mrb[0].mxu0
        %v828 = vadd.f32 %v572, %v827
        %v829 = vpop.f32.mrb[0].mxu0
        %v830 = vadd.f32 %v576, %v829
        %831 = vmatprep.mubr.bf16.mxu0 %v532
        %832 = vmatmul.mubr.bf16.gmra.mrb[0].mxu0 %v531
        %v833 = vpop.f32.mrb[0].mxu0
        %v834 = vadd.f32 %v572, %v833
        %v835 = vpop.f32.mrb[0].mxu0
        %v836 = vadd.f32 %v576, %v835
        %v837 = vpop.f32.mrb[0].mxu0
        %v838 = vadd.f32 %v572, %v837
        %v839 = vpop.f32.mrb[0].mxu0
        %v840 = vadd.f32 %v576, %v839
        %841 = vmatprep.mubr.bf16.mxu0 %v534
        %842 = vmatmul.mubr.bf16.gmra.mrb[0].mxu0 %v533
        %v843 = vpop.f32.mrb[0].mxu0
        %v844 = vadd.f32 %v572, %v843
        %v845 = vpop.f32.mrb[0].mxu0
        %v846 = vadd.f32 %v576, %v845
        %v847 = vpop.f32.mrb[0].mxu0
        %v848 = vadd.f32 %v572, %v847
        %v849 = vpop.f32.mrb[0].mxu0
        %v850 = vadd.f32 %v576, %v849
        %851 = vdwg.mxu0
        %v852 = vmax.f32 %v774, 0.0
        %v853 = vmax.f32 %v776, 0.0
        %v854 = vmax.f32 %v778, 0.0
        %v855 = vmax.f32 %v780, 0.0
        %v856 = vmax.f32 %v784, 0.0
        %v857 = vmax.f32 %v786, 0.0
        %v858 = vmax.f32 %v788, 0.0
        %v859 = vmax.f32 %v790, 0.0
        %v860 = vmax.f32 %v794, 0.0
        %v861 = vmax.f32 %v796, 0.0
        %v862 = vmax.f32 %v798, 0.0
        %v863 = vmax.f32 %v800, 0.0
        %v864 = vmax.f32 %v804, 0.0
        %v865 = vmax.f32 %v806, 0.0
        %v866 = vmax.f32 %v808, 0.0
        %v867 = vmax.f32 %v810, 0.0
        %v868 = vmax.f32 %v814, 0.0
        %v869 = vmax.f32 %v816, 0.0
        %v870 = vmax.f32 %v818, 0.0
        %v871 = vmax.f32 %v820, 0.0
        %v872 = vmax.f32 %v824, 0.0
        %v873 = vmax.f32 %v826, 0.0
        %v874 = vmax.f32 %v828, 0.0
        %v875 = vmax.f32 %v830, 0.0
        %v876 = vmax.f32 %v834, 0.0
        %v877 = vmax.f32 %v836, 0.0
        %v878 = vmax.f32 %v838, 0.0
        %v879 = vmax.f32 %v840, 0.0
        %v880 = vmax.f32 %v844, 0.0
        %v881 = vmax.f32 %v846, 0.0
        %v882 = vmax.f32 %v848, 0.0
        %v883 = vmax.f32 %v850, 0.0
        %v884 = vpack.c.bf16 %v854, %v852
        %v885 = vpack.c.bf16 %v855, %v853
        %v886 = vpack.c.bf16 %v858, %v856
        %v887 = vpack.c.bf16 %v859, %v857
        %v888 = vpack.c.bf16 %v862, %v860
        %v889 = vpack.c.bf16 %v863, %v861
        %v890 = vpack.c.bf16 %v866, %v864
        %v891 = vpack.c.bf16 %v867, %v865
        %v892 = vpack.c.bf16 %v870, %v868
        %v893 = vpack.c.bf16 %v871, %v869
        %v894 = vpack.c.bf16 %v874, %v872
        %v895 = vpack.c.bf16 %v875, %v873
        %v896 = vpack.c.bf16 %v878, %v876
        %v897 = vpack.c.bf16 %v879, %v877
        %v898 = vpack.c.bf16 %v882, %v880
        %v899 = vpack.c.bf16 %v883, %v881
        %v900 = vld [vmem:[#allocation2] sm:$0xf]
        %v901 = vld [vmem:[#allocation2 + $0x4] sm:$0xf]
        %v902 = vld [vmem:[#allocation2 + $0x8] sm:$0xf]
        %v903 = vld [vmem:[#allocation2 + $0xc] sm:$0xf]
        %v904 = vld [vmem:[#allocation2 + $0x10] sm:$0xf]
        %v905 = vld [vmem:[#allocation2 + $0x14] sm:$0xf]
        %v906 = vld [vmem:[#allocation2 + $0x18] sm:$0xf]
        %v907 = vld [vmem:[#allocation2 + $0x1c] sm:$0xf]
        %v908 = vld [vmem:[#allocation2 + $0x20] sm:$0xf]
        %v909 = vld [vmem:[#allocation2 + $0x24] sm:$0xf]
        %v910 = vld [vmem:[#allocation2 + $0x28] sm:$0xf]
        %v911 = vld [vmem:[#allocation2 + $0x2c] sm:$0xf]
        %v912 = vld [vmem:[#allocation2 + $0x30] sm:$0xf]
        %v913 = vld [vmem:[#allocation2 + $0x34] sm:$0xf]
        %v914 = vld [vmem:[#allocation2 + $0x38] sm:$0xf]
        %v915 = vld [vmem:[#allocation2 + $0x3c] sm:$0xf]
        %v916 = vld [vmem:[#allocation2 + $0x40] sm:$0xf]
        %v917 = vld [vmem:[#allocation2 + $0x44] sm:$0xf]
        %v918 = vld [vmem:[#allocation2 + $0x48] sm:$0xf]
        %v919 = vld [vmem:[#allocation2 + $0x4c] sm:$0xf]
        %v920 = vld [vmem:[#allocation2 + $0x50] sm:$0xf]
        %v921 = vld [vmem:[#allocation2 + $0x54] sm:$0xf]
        %v922 = vld [vmem:[#allocation2 + $0x58] sm:$0xf]
        %v923 = vld [vmem:[#allocation2 + $0x5c] sm:$0xf]
        %v924 = vld [vmem:[#allocation2 + $0x60] sm:$0xf]
        %v925 = vld [vmem:[#allocation2 + $0x64] sm:$0xf]
        %v926 = vld [vmem:[#allocation2 + $0x68] sm:$0xf]
        %v927 = vld [vmem:[#allocation2 + $0x6c] sm:$0xf]
        %v928 = vld [vmem:[#allocation2 + $0x70] sm:$0xf]
        %v929 = vld [vmem:[#allocation2 + $0x74] sm:$0xf]
        %v930 = vld [vmem:[#allocation2 + $0x78] sm:$0xf]
        %v931 = vld [vmem:[#allocation2 + $0x7c] sm:$0xf]
        %v932 = vld [vmem:[%s6] sm:$0x1]
        %v934 = vlaneseq
        %v935 = vshrl.u32 %v934, 7
        %v936 = vsub.s32 0, %v935
        %v937 = vrot.slane %v932, %v936
        %v971 = vunpack.c.l.b16 %v900
        %v972 = vunpack.c.l.b16 %v901
        %v973 = vunpack.c.l.b16 %v902
        %v974 = vunpack.c.l.b16 %v903
        %v975 = vunpack.c.l.b16 %v904
        %v976 = vunpack.c.l.b16 %v905
        %v977 = vunpack.c.l.b16 %v906
        %v978 = vunpack.c.l.b16 %v907
        %v979 = vunpack.c.l.b16 %v908
        %v980 = vunpack.c.l.b16 %v909
        %v981 = vunpack.c.l.b16 %v910
        %v982 = vunpack.c.l.b16 %v911
        %v983 = vunpack.c.l.b16 %v912
        %v984 = vunpack.c.l.b16 %v913
        %v985 = vunpack.c.l.b16 %v914
        %v986 = vunpack.c.l.b16 %v915
        %v987 = vunpack.c.l.b16 %v916
        %v988 = vunpack.c.l.b16 %v917
        %v989 = vunpack.c.l.b16 %v918
        %v990 = vunpack.c.l.b16 %v919
        %v991 = vunpack.c.l.b16 %v920
        %v992 = vunpack.c.l.b16 %v921
        %v993 = vunpack.c.l.b16 %v922
        %v994 = vunpack.c.l.b16 %v923
        %v995 = vunpack.c.l.b16 %v924
        %v996 = vunpack.c.l.b16 %v925
        %v997 = vunpack.c.l.b16 %v926
        %v998 = vunpack.c.l.b16 %v927
        %v999 = vunpack.c.l.b16 %v928
        %v1000 = vunpack.c.l.b16 %v929
        %v1001 = vunpack.c.l.b16 %v930
        %v1002 = vunpack.c.l.b16 %v931
        %v1003 = vpack.c.b16 %v972, %v971
        %v1004 = vpack.c.b16 %v974, %v973
        %v1005 = vpack.c.b16 %v976, %v975
        %v1006 = vpack.c.b16 %v978, %v977
        %v1007 = vpack.c.b16 %v980, %v979
        %v1008 = vpack.c.b16 %v982, %v981
        %v1009 = vpack.c.b16 %v984, %v983
        %v1010 = vpack.c.b16 %v986, %v985
        %v1011 = vpack.c.b16 %v988, %v987
        %v1012 = vpack.c.b16 %v990, %v989
        %v1013 = vpack.c.b16 %v992, %v991
        %v1014 = vpack.c.b16 %v994, %v993
        %v1015 = vpack.c.b16 %v996, %v995
        %v1016 = vpack.c.b16 %v998, %v997
        %v1017 = vpack.c.b16 %v1000, %v999
        %v1018 = vpack.c.b16 %v1002, %v1001
        %1035 = vmatprep.subr.bf16.mxu0 0
        %1036 = vmatpush1.bf16.msra.mxu0 %v1003
        %1037 = vmatprep.subr.bf16.mxu0 0
        %1038 = vmatpush1.bf16.msra.mxu0 %v1004
        %1039 = vmatprep.subr.bf16.mxu0 0
        %1040 = vmatpush1.bf16.msra.mxu0 %v1005
        %1041 = vmatprep.subr.bf16.mxu0 0
        %1042 = vmatpush1.bf16.msra.mxu0 %v1006
        %1043 = vmatprep.subr.bf16.mxu0 0
        %1044 = vmatpush1.bf16.msra.mxu0 %v1007
        %1045 = vmatprep.subr.bf16.mxu0 0
        %1046 = vmatpush1.bf16.msra.mxu0 %v1008
        %1047 = vmatprep.subr.bf16.mxu0 0
        %1048 = vmatpush1.bf16.msra.mxu0 %v1009
        %1049 = vmatprep.subr.bf16.mxu0 0
        %1050 = vmatpush1.bf16.msra.mxu0 %v1010
        %1051 = vmatprep.subr.bf16.mxu0 0
        %1052 = vmatpush1.bf16.msra.mxu0 %v1011
        %1053 = vmatprep.subr.bf16.mxu0 0
        %1054 = vmatpush1.bf16.msra.mxu0 %v1012
        %1055 = vmatprep.subr.bf16.mxu0 0
        %1056 = vmatpush1.bf16.msra.mxu0 %v1013
        %1057 = vmatprep.subr.bf16.mxu0 0
        %1058 = vmatpush1.bf16.msra.mxu0 %v1014
        %1059 = vmatprep.subr.bf16.mxu0 0
        %1060 = vmatpush1.bf16.msra.mxu0 %v1015
        %1061 = vmatprep.subr.bf16.mxu0 0
        %1062 = vmatpush1.bf16.msra.mxu0 %v1016
        %1063 = vmatprep.subr.bf16.mxu0 0
        %1064 = vmatpush1.bf16.msra.mxu0 %v1017
        %1065 = vmatprep.subr.bf16.mxu0 0
        %1066 = vmatpush1.bf16.msra.mxu0 %v1018
        %1067 = vmatprep.mubr.bf16.mxu0 %v885
        %1068 = vmatmul.mubr.bf16.gmra.mrb[0].mxu0 %v884
        %v1069 = vpop.f32.mrb[0].mxu0
        %v1070 = vadd.f32 %v937, %v1069
        %v1071 = vpop.f32.mrb[0].mxu0
        %v1072 = vpop.f32.mrb[0].mxu0
        %v1073 = vadd.f32 %v937, %v1072
        %v1074 = vpop.f32.mrb[0].mxu0
        %1075 = vmatprep.mubr.bf16.mxu0 %v887
        %1076 = vmatmul.mubr.bf16.gmra.mrb[0].mxu0 %v886
        %v1077 = vpop.f32.mrb[0].mxu0
        %v1078 = vadd.f32 %v937, %v1077
        %v1079 = vpop.f32.mrb[0].mxu0
        %v1080 = vpop.f32.mrb[0].mxu0
        %v1081 = vadd.f32 %v937, %v1080
        %v1082 = vpop.f32.mrb[0].mxu0
        %1083 = vmatprep.mubr.bf16.mxu0 %v889
        %1084 = vmatmul.mubr.bf16.gmra.mrb[0].mxu0 %v888
        %v1085 = vpop.f32.mrb[0].mxu0
        %v1086 = vadd.f32 %v937, %v1085
        %v1087 = vpop.f32.mrb[0].mxu0
        %v1088 = vpop.f32.mrb[0].mxu0
        %v1089 = vadd.f32 %v937, %v1088
        %v1090 = vpop.f32.mrb[0].mxu0
        %1091 = vmatprep.mubr.bf16.mxu0 %v891
        %1092 = vmatmul.mubr.bf16.gmra.mrb[0].mxu0 %v890
        %v1093 = vpop.f32.mrb[0].mxu0
        %v1094 = vadd.f32 %v937, %v1093
        %v1095 = vpop.f32.mrb[0].mxu0
        %v1096 = vpop.f32.mrb[0].mxu0
        %v1097 = vadd.f32 %v937, %v1096
        %v1098 = vpop.f32.mrb[0].mxu0
        %1099 = vmatprep.mubr.bf16.mxu0 %v893
        %1100 = vmatmul.mubr.bf16.gmra.mrb[0].mxu0 %v892
        %v1101 = vpop.f32.mrb[0].mxu0
        %v1102 = vadd.f32 %v937, %v1101
        %v1103 = vpop.f32.mrb[0].mxu0
        %v1104 = vpop.f32.mrb[0].mxu0
        %v1105 = vadd.f32 %v937, %v1104
        %v1106 = vpop.f32.mrb[0].mxu0
        %1107 = vmatprep.mubr.bf16.mxu0 %v895
        %1108 = vmatmul.mubr.bf16.gmra.mrb[0].mxu0 %v894
        %v1109 = vpop.f32.mrb[0].mxu0
        %v1110 = vadd.f32 %v937, %v1109
        %v1111 = vpop.f32.mrb[0].mxu0
        %v1112 = vpop.f32.mrb[0].mxu0
        %v1113 = vadd.f32 %v937, %v1112
        %v1114 = vpop.f32.mrb[0].mxu0
        %1115 = vmatprep.mubr.bf16.mxu0 %v897
        %1116 = vmatmul.mubr.bf16.gmra.mrb[0].mxu0 %v896
        %v1117 = vpop.f32.mrb[0].mxu0
        %v1118 = vadd.f32 %v937, %v1117
        %v1119 = vpop.f32.mrb[0].mxu0
        %v1120 = vpop.f32.mrb[0].mxu0
        %v1121 = vadd.f32 %v937, %v1120
        %v1122 = vpop.f32.mrb[0].mxu0
        %1123 = vmatprep.mubr.bf16.mxu0 %v899
        %1124 = vmatmul.mubr.bf16.gmra.mrb[0].mxu0 %v898
        %v1125 = vpop.f32.mrb[0].mxu0
        %v1126 = vadd.f32 %v937, %v1125
        %v1127 = vpop.f32.mrb[0].mxu0
        %v1128 = vpop.f32.mrb[0].mxu0
        %v1129 = vadd.f32 %v937, %v1128
        %v1130 = vpop.f32.mrb[0].mxu0
        %1131 = vdwg.mxu0
        %v1132 = vtanh.pop %v1070
        %v1133 = vtanh.pop %v1073
        %v1134 = vtanh.pop %v1078
        %v1135 = vtanh.pop %v1081
        %v1136 = vtanh.pop %v1086
        %v1137 = vtanh.pop %v1089
        %v1138 = vtanh.pop %v1094
        %v1139 = vtanh.pop %v1097
        %v1140 = vtanh.pop %v1102
        %v1141 = vtanh.pop %v1105
        %v1142 = vtanh.pop %v1110
        %v1143 = vtanh.pop %v1113
        %v1144 = vtanh.pop %v1118
        %v1145 = vtanh.pop %v1121
        %v1146 = vtanh.pop %v1126
        %v1147 = vtanh.pop %v1129
        %1148 = vst [vmem:[%s287] sm:$0xff] %v1132
        %1149 = vst [vmem:[%s287 + $0x8] sm:$0xff] %v1133
        %1150 = vst [vmem:[%s287 + $0x10] sm:$0xff] %v1134
        %1151 = vst [vmem:[%s287 + $0x18] sm:$0xff] %v1135
        %1152 = vst [vmem:[%s287 + $0x20] sm:$0xff] %v1136
        %1153 = vst [vmem:[%s287 + $0x28] sm:$0xff] %v1137
        %1154 = vst [vmem:[%s287 + $0x30] sm:$0xff] %v1138
        %1155 = vst [vmem:[%s287 + $0x38] sm:$0xff] %v1139
        %1156 = vst [vmem:[%s287 + $0x40] sm:$0xff] %v1140
        %1157 = vst [vmem:[%s287 + $0x48] sm:$0xff] %v1141
        %1158 = vst [vmem:[%s287 + $0x50] sm:$0xff] %v1142
        %1159 = vst [vmem:[%s287 + $0x58] sm:$0xff] %v1143
        %1160 = vst [vmem:[%s287 + $0x60] sm:$0xff] %v1144
        %1161 = vst [vmem:[%s287 + $0x68] sm:$0xff] %v1145
        %1162 = vst [vmem:[%s287 + $0x70] sm:$0xff] %v1146
        %1163 = vst [vmem:[%s287 + $0x78] sm:$0xff] %v1147
        %s1164 = sand.u32 %s182, 1
        %s1165 = scalar_lea.sflag [#allocation4], %s1164
        %s1166 = sand.u32 %s182, 1
        %s1167 = smul.addr %s1166, 128
        %s1168 = scalar_lea.vmem [#allocation5], %s1167
        // Predicated region
        $region53: #{tpu_custom_call.1} parent=47 // pred_check
          %p1169 = pneg %p192
        $region54: #{tpu_custom_call.1} parent=47 // pred_check_branch
          %1171 = sbr.rel (%p1169) target = $region56
        $region55: #{tpu_custom_call.1} parent=47 // pred_region
          %s1172 = smul.u32 16, %s22
          %s1174 = ssub.s32 2048, 2048
          %1175 = vsyncadd %s1165, %s1174
          %s1176 = smul.addr %s1172, 128
          %s1177 = scalar_lea.hbm %s7, %s1176
          %s1178 = sshll.u32 %s1168, 4
          %s1179 = int_to_ptr.vmem [resolvable:$true] %s1178
          %1184 = dma.vmem_to_hbm [thread:$0]  %s1179, 2048, %s1177, %s1165, 128, 128, 8
        $region56: #{tpu_custom_call.1} parent=47 // pred_fallthru
          _
      $region48: #{tpu_custom_call.1} parent=5 // pred_fallthru
        _
      %p1185 = scmp.le.s32.totalorder 2, %s17
      // Predicated region
      $region57: #{tpu_custom_call.1} parent=5 // pred_check
        %p1186 = pneg %p1185
      $region58: #{tpu_custom_call.1} parent=5 // pred_check_branch
        %1188 = sbr.rel (%p1186) target = $region60
      $region59: #{tpu_custom_call.1} parent=5 // pred_region
        %s1189 = ssub.s32 %s17, 2
        // Predicated region
        $region61: #{tpu_custom_call.1} parent=59 // pred_check
          %p1190 = pneg %p198
        $region62: #{tpu_custom_call.1} parent=59 // pred_check_branch
          %1192 = sbr.rel (%p1190) target = $region64
        $region63: #{tpu_custom_call.1} parent=59 // pred_region
          %s1193 = sand.u32 %s183, 1
          %s1194 = scalar_lea.sflag [#allocation4], %s1193
          %s1195 = sand.u32 %s183, 1
          %s1196 = smul.addr %s1195, 128
          %s1197 = scalar_lea.vmem [#allocation5], %s1196
          %1198 = dma.done %s1194, 2048
        $region64: #{tpu_custom_call.1} parent=59 // pred_fallthru
          _
      $region60: #{tpu_custom_call.1} parent=5 // pred_fallthru
        _
    $region6: #{tpu_custom_call.1} parent=1 // loop_footer
      %s21 = sadd.s32 1, %s17
    $region7: #{tpu_custom_call.1} parent=1 // loop_footer_branch
      %16 = sbr.rel target = $region3
    $region8: #{tpu_custom_call.1} parent=1 // loop_exit
      _
    %1199 = vsyncpa [#allocation3], 1
    %s1200 = scalar_lea.sflag [#allocation3], 1
    %1201 = vsyncpa %s1200, 1
    %1202 = vsyncpa [#allocation4], 1
    %s1203 = scalar_lea.sflag [#allocation4], 1
    %1204 = vsyncpa %s1203, 1

</llo_original>
